<compile_context>
chip_gen: v7x
topology: tpu7x:2x2x1
jax: 0.10.0
libtpu: 0.0.40
codegen_flags: <defaults>
</compile_context>

<pallas_src>
import functools
from typing import Dict

import jax
import jax.numpy as jnp
from jax.experimental import pallas as pl
from jax.experimental.pallas import tpu as pltpu


def _round_up(x: int, m: int) -> int:
    return (x + m - 1) // m * m


# ----------------------------- Pallas kernel --------------------------------
def _make_conv_kernel(ksize: int, wp: int, l_out: int, c_out: int):
    """Fused conv3x3 + bias + ReLU on one image's flattened padded slab."""
    taps = [(dh, dw) for dh in range(ksize) for dw in range(ksize)]

    def kernel(x_ref, w_ref, b_ref, o_ref):
        # x_ref: (1, C_in_pad, L_in)   bf16   (flattened zero-padded image)
        # w_ref: (k*k, C_out, C_in_pad) bf16  (per-tap weight matrices)
        # b_ref: (C_out, 1)            f32
        # o_ref: (1, C_out, L_out)     f32
        x = x_ref[0]                                   # (C_in_pad, L_in)
        acc = jnp.zeros((c_out, l_out), jnp.float32)
        for t, (dh, dw) in enumerate(taps):
            s = dh * wp + dw                           # static lane offset
            xs = x[:, s:s + l_out]                     # (C_in_pad, L_out)
            acc += jnp.dot(w_ref[t], xs,
                           preferred_element_type=jnp.float32)
        acc += b_ref[...]                              # (C_out, 1) lane-broadcast
        o_ref[0] = jnp.maximum(acc, 0.0).astype(o_ref.dtype)

    return kernel


def _conv_bias_relu_pallas(xflat, w_taps, bias_col, *, ksize, wp, l_out):
    """xflat: (N, C_in_pad, L_in) bf16, w_taps: (k*k, C_out, C_in_pad) bf16,
    bias_col: (C_out, 1) f32  ->  (N, C_out, L_out) f32."""
    N, c_in_pad, l_in = xflat.shape
    kk, c_out, _ = w_taps.shape
    assert kk == ksize * ksize

    kernel = _make_conv_kernel(ksize, wp, l_out, c_out)

    flops = 2 * N * kk * c_out * c_in_pad * l_out
    bytes_accessed = (xflat.size * 2 + w_taps.size * 2 + bias_col.size * 4
                      + N * c_out * l_out * 4)

    return pl.pallas_call(
        kernel,
        out_shape=jax.ShapeDtypeStruct((N, c_out, l_out), jnp.float32),
        grid_spec=pltpu.PrefetchScalarGridSpec(
            num_scalar_prefetch=0,
            grid=(N,),
            in_specs=[
                pl.BlockSpec((1, c_in_pad, l_in), lambda n: (n, 0, 0)),
                pl.BlockSpec((kk, c_out, c_in_pad), lambda n: (0, 0, 0)),
                pl.BlockSpec((c_out, 1), lambda n: (0, 0)),
            ],
            out_specs=pl.BlockSpec((1, c_out, l_out), lambda n: (n, 0, 0)),
        ),
        compiler_params=pltpu.CompilerParams(
            dimension_semantics=("parallel",),
            vmem_limit_bytes=32 * 1024 * 1024),
        cost_estimate=pl.CostEstimate(flops=flops, transcendentals=0,
                                      bytes_accessed=bytes_accessed),
    )(xflat, w_taps, bias_col)


# ------------------------------ wrapper (plain JAX glue) ---------------------
class TRTWrapperTPU:
    """JAX/Pallas stand-in for TRTWrapper: dict of inputs -> dict of outputs."""

    def __init__(self, c_in=4, c_out=8, ksize=3,
                 input_name="input", output_name="output"):
        self._input_names = [input_name]
        self._output_names = [output_name]
        self.ksize = ksize
        self.pad = ksize // 2
        self.c_in = c_in
        self.c_out = c_out
        self.c_in_pad = _round_up(c_in, 8)        # sublane-aligned contraction

        # Deterministic "engine" parameters (PyTorch conv weight layout
        # (C_out, C_in, kH, kW)).
        kw_key, kb_key = jax.random.split(jax.random.PRNGKey(42))
        self.weight = jax.random.normal(
            kw_key, (c_out, c_in, ksize, ksize), jnp.float32) * 0.1
        self.bias = jax.random.normal(kb_key, (c_out,), jnp.float32) * 0.1

        # Per-tap weight matrices, tap index t = dh*k + dw, zero-padded C_in,
        # cast to bf16 (engine precision); bias stays f32 for the accumulator.
        w_perm = jnp.transpose(self.weight, (2, 3, 0, 1)).reshape(
            ksize * ksize, c_out, c_in)
        self.w_taps = jnp.pad(
            w_perm, ((0, 0), (0, 0), (0, self.c_in_pad - c_in))
        ).astype(jnp.bfloat16)
        self.bias_col = self.bias.reshape(c_out, 1).astype(jnp.float32)

    @functools.partial(jax.jit, static_argnums=0)
    def _run(self, x_nchw):
        N, C, H, W = x_nchw.shape
        k, p = self.ksize, self.pad
        hp, wp = H + 2 * p, W + 2 * p

        # Lane-dense sizes (multiples of 128).
        l_out = _round_up(H * wp, 128)
        s_max = (k - 1) * wp + (k - 1)
        l_in = _round_up(l_out + s_max, 128)       # >= hp*wp always

        # Zero-pad channels + spatial halo, flatten spatial into lanes.
        # Note: no NCHW<->NHWC transpose anywhere.
        xpad = jnp.pad(x_nchw,
                       ((0, 0), (0, self.c_in_pad - C), (p, p), (p, p)))
        xflat = xpad.reshape(N, self.c_in_pad, hp * wp)
        xflat = jnp.pad(xflat, ((0, 0), (0, 0), (0, l_in - hp * wp)))
        xflat = xflat.astype(jnp.bfloat16)

        out_flat = _conv_bias_relu_pallas(
            xflat, self.w_taps, self.bias_col, ksize=k, wp=wp, l_out=l_out)

        # Layout plumbing only: drop the padded-width columns.
        y = out_flat[:, :, :H * wp].reshape(N, self.c_out, H, wp)[:, :, :, :W]
        return y                                    # NCHW

    def forward(self, inputs: Dict[str, jnp.ndarray]) -> Dict[str, jnp.ndarray]:
        x = inputs[self._input_names[0]]
        return {name: self._run(x) for name in self._output_names}

    __call__ = forward


# ---------------------------------- main -------------------------------------
if __name__ == "__main__":
    key = jax.random.PRNGKey(0)
    x = jax.random.normal(key, (2, 4, 16, 16), jnp.float32)   # NCHW

    wrapper = TRTWrapperTPU(c_in=4, c_out=8, ksize=3)
    outputs = wrapper({"input": x})
    y = jax.block_until_ready(outputs["output"])
    assert y.shape == (2, 8, 16, 16)

    # Reference semantics of the synthetic engine: bf16 conv3x3 pad=1 with f32
    # accumulation + bias + ReLU in NCHW (tolerance loosened for bf16 inputs).
    x_bf = x.astype(jnp.bfloat16)
    w_bf = wrapper.weight.astype(jnp.bfloat16)
    ref = jax.lax.conv_general_dilated(
        x_bf, w_bf, window_strides=(1, 1), padding="SAME",
        dimension_numbers=("NCHW", "OIHW", "NCHW"),
        preferred_element_type=jnp.float32)
    ref = jnp.maximum(ref + wrapper.bias[None, :, None, None], 0.0)
    max_err = float(jnp.max(jnp.abs(y - ref)))
    assert jnp.allclose(y, ref, atol=2e-2, rtol=2e-2), max_err

    print("KERNEL_OK")
</pallas_src>

<mosaic_0001>
module attributes {stable_mosaic.version = 11 : i64} {
  func.func @kernel(%arg0: i32, %arg1: memref<1x8x512xbf16, #tpu.memory_space<vmem>>, %arg2: memref<9x8x8xbf16, #tpu.memory_space<vmem>>, %arg3: memref<8x1xf32, #tpu.memory_space<vmem>>, %arg4: memref<1x8x384xf32, #tpu.memory_space<vmem>>) attributes {dimension_semantics = [#tpu.dimension_semantics<parallel>], iteration_bounds = array<i64: 2>, scalar_prefetch = 0 : i64, scratch_operands = 0 : i64, tpu.core_type = #tpu.core_type<tc>, window_params = [{transform_indices = @transform_0, window_bounds = array<i64: 1, 8, 512>}, {pipeline_mode = #tpu.pipeline_mode<synchronous>, transform_indices = @transform_1, window_bounds = array<i64: 9, 8, 8>}, {pipeline_mode = #tpu.pipeline_mode<synchronous>, transform_indices = @transform_2, window_bounds = array<i64: 8, 1>}, {transform_indices = @transform_3, window_bounds = array<i64: 1, 8, 384>}]} {
    %c0 = arith.constant 0 : index
    %c0_0 = arith.constant 0 : index
    %c0_1 = arith.constant 0 : index
    %0 = vector.load %arg1[%c0, %c0_0, %c0_1] : memref<1x8x512xbf16, #tpu.memory_space<vmem>>, vector<1x8x512xbf16>
    %1 = vector.shape_cast %0 : vector<1x8x512xbf16> to vector<8x512xbf16>
    %cst = arith.constant 0.000000e+00 : f32
    %2 = vector.broadcast %cst : f32 to vector<8x384xf32>
    %3 = vector.extract_strided_slice %1 {offsets = [0, 0], sizes = [8, 384], strides = [1, 1]} : vector<8x512xbf16> to vector<8x384xbf16>
    %c0_2 = arith.constant 0 : index
    %c0_3 = arith.constant 0 : index
    %c0_4 = arith.constant 0 : index
    %4 = vector.load %arg2[%c0_2, %c0_3, %c0_4] : memref<9x8x8xbf16, #tpu.memory_space<vmem>>, vector<1x8x8xbf16>
    %5 = vector.shape_cast %4 : vector<1x8x8xbf16> to vector<8x8xbf16>
    %cst_5 = arith.constant dense<0.000000e+00> : vector<8x384xf32>
    %6 = tpu.matmul %5, %3, %cst_5 {dimension_numbers = #tpu.dot_dimension_numbers<[1], [0], [0], [1], [0, 0, 1, 1], [], []>} : vector<8x8xbf16>, vector<8x384xbf16>, vector<8x384xf32> -> vector<8x384xf32>
    %7 = arith.addf %2, %6 : vector<8x384xf32>
    %8 = vector.extract_strided_slice %1 {offsets = [0, 1], sizes = [8, 384], strides = [1, 1]} : vector<8x512xbf16> to vector<8x384xbf16>
    %c1 = arith.constant 1 : index
    %c0_6 = arith.constant 0 : index
    %c0_7 = arith.constant 0 : index
    %9 = vector.load %arg2[%c1, %c0_6, %c0_7] : memref<9x8x8xbf16, #tpu.memory_space<vmem>>, vector<1x8x8xbf16>
    %10 = vector.shape_cast %9 : vector<1x8x8xbf16> to vector<8x8xbf16>
    %cst_8 = arith.constant dense<0.000000e+00> : vector<8x384xf32>
    %11 = tpu.matmul %10, %8, %cst_8 {dimension_numbers = #tpu.dot_dimension_numbers<[1], [0], [0], [1], [0, 0, 1, 1], [], []>} : vector<8x8xbf16>, vector<8x384xbf16>, vector<8x384xf32> -> vector<8x384xf32>
    %12 = arith.addf %7, %11 : vector<8x384xf32>
    %13 = vector.extract_strided_slice %1 {offsets = [0, 2], sizes = [8, 384], strides = [1, 1]} : vector<8x512xbf16> to vector<8x384xbf16>
    %c2 = arith.constant 2 : index
    %c0_9 = arith.constant 0 : index
    %c0_10 = arith.constant 0 : index
    %14 = vector.load %arg2[%c2, %c0_9, %c0_10] : memref<9x8x8xbf16, #tpu.memory_space<vmem>>, vector<1x8x8xbf16>
    %15 = vector.shape_cast %14 : vector<1x8x8xbf16> to vector<8x8xbf16>
    %cst_11 = arith.constant dense<0.000000e+00> : vector<8x384xf32>
    %16 = tpu.matmul %15, %13, %cst_11 {dimension_numbers = #tpu.dot_dimension_numbers<[1], [0], [0], [1], [0, 0, 1, 1], [], []>} : vector<8x8xbf16>, vector<8x384xbf16>, vector<8x384xf32> -> vector<8x384xf32>
    %17 = arith.addf %12, %16 : vector<8x384xf32>
    %18 = vector.extract_strided_slice %1 {offsets = [0, 18], sizes = [8, 384], strides = [1, 1]} : vector<8x512xbf16> to vector<8x384xbf16>
    %c3 = arith.constant 3 : index
    %c0_12 = arith.constant 0 : index
    %c0_13 = arith.constant 0 : index
    %19 = vector.load %arg2[%c3, %c0_12, %c0_13] : memref<9x8x8xbf16, #tpu.memory_space<vmem>>, vector<1x8x8xbf16>
    %20 = vector.shape_cast %19 : vector<1x8x8xbf16> to vector<8x8xbf16>
    %cst_14 = arith.constant dense<0.000000e+00> : vector<8x384xf32>
    %21 = tpu.matmul %20, %18, %cst_14 {dimension_numbers = #tpu.dot_dimension_numbers<[1], [0], [0], [1], [0, 0, 1, 1], [], []>} : vector<8x8xbf16>, vector<8x384xbf16>, vector<8x384xf32> -> vector<8x384xf32>
    %22 = arith.addf %17, %21 : vector<8x384xf32>
    %23 = vector.extract_strided_slice %1 {offsets = [0, 19], sizes = [8, 384], strides = [1, 1]} : vector<8x512xbf16> to vector<8x384xbf16>
    %c4 = arith.constant 4 : index
    %c0_15 = arith.constant 0 : index
    %c0_16 = arith.constant 0 : index
    %24 = vector.load %arg2[%c4, %c0_15, %c0_16] : memref<9x8x8xbf16, #tpu.memory_space<vmem>>, vector<1x8x8xbf16>
    %25 = vector.shape_cast %24 : vector<1x8x8xbf16> to vector<8x8xbf16>
    %cst_17 = arith.constant dense<0.000000e+00> : vector<8x384xf32>
    %26 = tpu.matmul %25, %23, %cst_17 {dimension_numbers = #tpu.dot_dimension_numbers<[1], [0], [0], [1], [0, 0, 1, 1], [], []>} : vector<8x8xbf16>, vector<8x384xbf16>, vector<8x384xf32> -> vector<8x384xf32>
    %27 = arith.addf %22, %26 : vector<8x384xf32>
    %28 = vector.extract_strided_slice %1 {offsets = [0, 20], sizes = [8, 384], strides = [1, 1]} : vector<8x512xbf16> to vector<8x384xbf16>
    %c5 = arith.constant 5 : index
    %c0_18 = arith.constant 0 : index
    %c0_19 = arith.constant 0 : index
    %29 = vector.load %arg2[%c5, %c0_18, %c0_19] : memref<9x8x8xbf16, #tpu.memory_space<vmem>>, vector<1x8x8xbf16>
    %30 = vector.shape_cast %29 : vector<1x8x8xbf16> to vector<8x8xbf16>
    %cst_20 = arith.constant dense<0.000000e+00> : vector<8x384xf32>
    %31 = tpu.matmul %30, %28, %cst_20 {dimension_numbers = #tpu.dot_dimension_numbers<[1], [0], [0], [1], [0, 0, 1, 1], [], []>} : vector<8x8xbf16>, vector<8x384xbf16>, vector<8x384xf32> -> vector<8x384xf32>
    %32 = arith.addf %27, %31 : vector<8x384xf32>
    %33 = vector.extract_strided_slice %1 {offsets = [0, 36], sizes = [8, 384], strides = [1, 1]} : vector<8x512xbf16> to vector<8x384xbf16>
    %c6 = arith.constant 6 : index
    %c0_21 = arith.constant 0 : index
    %c0_22 = arith.constant 0 : index
    %34 = vector.load %arg2[%c6, %c0_21, %c0_22] : memref<9x8x8xbf16, #tpu.memory_space<vmem>>, vector<1x8x8xbf16>
    %35 = vector.shape_cast %34 : vector<1x8x8xbf16> to vector<8x8xbf16>
    %cst_23 = arith.constant dense<0.000000e+00> : vector<8x384xf32>
    %36 = tpu.matmul %35, %33, %cst_23 {dimension_numbers = #tpu.dot_dimension_numbers<[1], [0], [0], [1], [0, 0, 1, 1], [], []>} : vector<8x8xbf16>, vector<8x384xbf16>, vector<8x384xf32> -> vector<8x384xf32>
    %37 = arith.addf %32, %36 : vector<8x384xf32>
    %38 = vector.extract_strided_slice %1 {offsets = [0, 37], sizes = [8, 384], strides = [1, 1]} : vector<8x512xbf16> to vector<8x384xbf16>
    %c7 = arith.constant 7 : index
    %c0_24 = arith.constant 0 : index
    %c0_25 = arith.constant 0 : index
    %39 = vector.load %arg2[%c7, %c0_24, %c0_25] : memref<9x8x8xbf16, #tpu.memory_space<vmem>>, vector<1x8x8xbf16>
    %40 = vector.shape_cast %39 : vector<1x8x8xbf16> to vector<8x8xbf16>
    %cst_26 = arith.constant dense<0.000000e+00> : vector<8x384xf32>
    %41 = tpu.matmul %40, %38, %cst_26 {dimension_numbers = #tpu.dot_dimension_numbers<[1], [0], [0], [1], [0, 0, 1, 1], [], []>} : vector<8x8xbf16>, vector<8x384xbf16>, vector<8x384xf32> -> vector<8x384xf32>
    %42 = arith.addf %37, %41 : vector<8x384xf32>
    %43 = vector.extract_strided_slice %1 {offsets = [0, 38], sizes = [8, 384], strides = [1, 1]} : vector<8x512xbf16> to vector<8x384xbf16>
    %c8 = arith.constant 8 : index
    %c0_27 = arith.constant 0 : index
    %c0_28 = arith.constant 0 : index
    %44 = vector.load %arg2[%c8, %c0_27, %c0_28] : memref<9x8x8xbf16, #tpu.memory_space<vmem>>, vector<1x8x8xbf16>
    %45 = vector.shape_cast %44 : vector<1x8x8xbf16> to vector<8x8xbf16>
    %cst_29 = arith.constant dense<0.000000e+00> : vector<8x384xf32>
    %46 = tpu.matmul %45, %43, %cst_29 {dimension_numbers = #tpu.dot_dimension_numbers<[1], [0], [0], [1], [0, 0, 1, 1], [], []>} : vector<8x8xbf16>, vector<8x384xbf16>, vector<8x384xf32> -> vector<8x384xf32>
    %47 = arith.addf %42, %46 : vector<8x384xf32>
    %c0_30 = arith.constant 0 : index
    %c0_31 = arith.constant 0 : index
    %48 = vector.load %arg3[%c0_30, %c0_31] : memref<8x1xf32, #tpu.memory_space<vmem>>, vector<8x1xf32>
    %49 = vector.broadcast %48 : vector<8x1xf32> to vector<8x384xf32>
    %50 = arith.addf %47, %49 : vector<8x384xf32>
    %cst_32 = arith.constant 0.000000e+00 : f32
    %51 = vector.broadcast %cst_32 : f32 to vector<8x384xf32>
    %52 = arith.maximumf %50, %51 : vector<8x384xf32>
    %c0_33 = arith.constant 0 : index
    %c0_34 = arith.constant 0 : index
    %c0_35 = arith.constant 0 : index
    %53 = vector.load %arg4[%c0_33, %c0_34, %c0_35] : memref<1x8x384xf32, #tpu.memory_space<vmem>>, vector<1x8x384xf32>
    %54 = vector.shape_cast %53 : vector<1x8x384xf32> to vector<8x384xf32>
    %55 = vector.shape_cast %52 : vector<8x384xf32> to vector<1x8x384xf32>
    tpu.vector_store %arg4[%c0_33, %c0_34, %c0_35], %55 {strides = array<i32>} : memref<1x8x384xf32, #tpu.memory_space<vmem>>, vector<1x8x384xf32>,
    return
  }
  func.func @transform_0(%arg0: i32) -> (i32, i32, i32) {
    %c0_i32 = arith.constant 0 : i32
    %c0_i32_0 = arith.constant 0 : i32
    %c0_i32_1 = arith.constant 0 : i32
    return %arg0, %c0_i32, %c0_i32_0 : i32, i32, i32
  }
  func.func @transform_1(%arg0: i32) -> (i32, i32, i32) {
    %c0_i32 = arith.constant 0 : i32
    %c0_i32_0 = arith.constant 0 : i32
    %c0_i32_1 = arith.constant 0 : i32
    %c0_i32_2 = arith.constant 0 : i32
    return %c0_i32, %c0_i32_0, %c0_i32_1 : i32, i32, i32
  }
  func.func @transform_2(%arg0: i32) -> (i32, i32) {
    %c0_i32 = arith.constant 0 : i32
    %c0_i32_0 = arith.constant 0 : i32
    %c0_i32_1 = arith.constant 0 : i32
    return %c0_i32, %c0_i32_0 : i32, i32
  }
  func.func @transform_3(%arg0: i32) -> (i32, i32, i32) {
    %c0_i32 = arith.constant 0 : i32
    %c0_i32_0 = arith.constant 0 : i32
    %c0_i32_1 = arith.constant 0 : i32
    return %arg0, %c0_i32, %c0_i32_0 : i32, i32, i32
  }
}

</mosaic_0001>

<llo_original>
// kernel: _run.1
$region0: #{_run.1}
  #allocation0 [shape = 'u32[]', space=smem, size = 0x4, offset = 0x4, fixed_abs, tag = 'smem constant byte address 0x4 - core index']
  #allocation1 [shape = 'u32[144,128]{1,0:T(1,128)}', space=vmem, size = 0x12000, scoped, tag = 'internal scratch']
  %s0 = inlined_call_operand.vmem [shape: bf16[2,8,512], index: 0, kind: input, shape index: {}]
  %s1 = inlined_call_operand.vmem [shape: bf16[9,8,8], index: 1, kind: input, shape index: {}]
  %s2 = inlined_call_operand.vmem [shape: f32[8,1], index: 2, kind: input, shape index: {}]
  %s3 = inlined_call_operand.vmem [shape: f32[2,8,384], index: 3, kind: output, shape index: {}]
  %s4 = sld [smem:[#allocation0]]
  $region45: #{_run.1} parent=0
    _
  %s6 = ssub.s32 1, %s4
  %s7 = scalar_select 0, %s6, %s4
  loop: start=0, step=1, limit=4
  $region2: #{_run.1} parent=0 // loop_pre_header
    _
  $region3: #{_run.1} parent=0 // loop_header
    %s9 = sphi 0, %s13
    %p10 = scmp.ge.s32.totalorder %s9, 4
    %s19 = sphi 0, %s21
    %s22 = sphi 0, %s19
    %s23 = sphi 0, %s22
    %s39 = sphi 0, %s23
    %s43 = sphi 0, %s43
    %s45 = sphi 0, %s43
    %s46 = sphi 0, %s45
    %s60 = sphi 0, %s46
    %s64 = sphi 0, %s64
    %s66 = sphi 0, %s64
    %s67 = sphi 0, %s66
    %s81 = sphi 0, %s67
    %s87 = sphi 0, %s89
    %s90 = sphi 0, %s87
    %s91 = sphi 0, %s90
    %s107 = sphi 0, %s91
  $region4: #{_run.1} parent=0 // loop_header_branch
    %12 = sbr.rel (%p10) target = $region8
  $region5: #{_run.1} parent=0 // loop_body
    %s14 = ssub.s32 %s9, 1
    %s15 = ssub.s32 %s9, 2
    %s16 = sadd.s32 %s9, 1
    %s17 = ssub.s32 %s9, %s16
    %p18 = scmp.eq.s32.totalorder %s17, 0
    %s20 = sadd.s32 %s19, 1
    %s21 = scalar_select %p18, %s19, %s20
    %p24 = pneg %p18
    %p25 = scmp.eq.s32.totalorder %s9, 1
    %p26 = por %p24, %p25
    %p27 = scmp.ne.s32.totalorder %s19, %s22
    %p28 = scmp.eq.s32.totalorder %s9, 0
    %p29 = por %p27, %p28
    %p30 = scmp.ne.s32.totalorder %s19, %s22
    %p31 = scmp.eq.s32.totalorder %s14, 1
    %p32 = por %p30, %p31
    %p33 = scmp.ne.s32.totalorder %s22, %s23
    %p34 = scmp.eq.s32.totalorder %s14, 0
    %p35 = por %p33, %p34
    %p36 = scmp.ne.s32.totalorder %s22, %s23
    %p37 = scmp.eq.s32.totalorder %s15, 1
    %p38 = por %p36, %p37
    %p40 = scmp.ne.s32.totalorder %s23, %s39
    %p41 = scmp.eq.s32.totalorder %s15, 0
    %p42 = por %p40, %p41
    %s44 = sadd.s32 %s43, 1
    %p47 = scmp.eq.s32.totalorder %s9, 1
    %p48 = scmp.ne.s32.totalorder %s43, %s45
    %p49 = scmp.eq.s32.totalorder %s9, 0
    %p50 = por %p48, %p49
    %p51 = scmp.ne.s32.totalorder %s43, %s45
    %p52 = scmp.eq.s32.totalorder %s14, 1
    %p53 = por %p51, %p52
    %p54 = scmp.ne.s32.totalorder %s45, %s46
    %p55 = scmp.eq.s32.totalorder %s14, 0
    %p56 = por %p54, %p55
    %p57 = scmp.ne.s32.totalorder %s45, %s46
    %p58 = scmp.eq.s32.totalorder %s15, 1
    %p59 = por %p57, %p58
    %p61 = scmp.ne.s32.totalorder %s46, %s60
    %p62 = scmp.eq.s32.totalorder %s15, 0
    %p63 = por %p61, %p62
    %s65 = sadd.s32 %s64, 1
    %p68 = scmp.eq.s32.totalorder %s9, 1
    %p69 = scmp.ne.s32.totalorder %s64, %s66
    %p70 = scmp.eq.s32.totalorder %s9, 0
    %p71 = por %p69, %p70
    %p72 = scmp.ne.s32.totalorder %s64, %s66
    %p73 = scmp.eq.s32.totalorder %s14, 1
    %p74 = por %p72, %p73
    %p75 = scmp.ne.s32.totalorder %s66, %s67
    %p76 = scmp.eq.s32.totalorder %s14, 0
    %p77 = por %p75, %p76
    %p78 = scmp.ne.s32.totalorder %s66, %s67
    %p79 = scmp.eq.s32.totalorder %s15, 1
    %p80 = por %p78, %p79
    %p82 = scmp.ne.s32.totalorder %s67, %s81
    %p83 = scmp.eq.s32.totalorder %s15, 0
    %p84 = por %p82, %p83
    %s85 = ssub.s32 %s9, %s16
    %p86 = scmp.eq.s32.totalorder %s85, 0
    %s88 = sadd.s32 %s87, 1
    %s89 = scalar_select %p86, %s87, %s88
    %p92 = pneg %p86
    %p93 = scmp.eq.s32.totalorder %s9, 1
    %p94 = por %p92, %p93
    %p95 = scmp.ne.s32.totalorder %s87, %s90
    %p96 = scmp.eq.s32.totalorder %s9, 0
    %p97 = por %p95, %p96
    %p98 = scmp.ne.s32.totalorder %s87, %s90
    %p99 = scmp.eq.s32.totalorder %s14, 1
    %p100 = por %p98, %p99
    %p101 = scmp.ne.s32.totalorder %s90, %s91
    %p102 = scmp.eq.s32.totalorder %s14, 0
    %p103 = por %p101, %p102
    %p104 = scmp.ne.s32.totalorder %s90, %s91
    %p105 = scmp.eq.s32.totalorder %s15, 1
    %p106 = por %p104, %p105
    %p108 = scmp.ne.s32.totalorder %s91, %s107
    %p109 = scmp.eq.s32.totalorder %s15, 0
    %p110 = por %p108, %p109
    %p111 = scmp.le.s32.totalorder 1, %s9
    %p112 = scmp.lt.s32.totalorder %s9, 3
    %p113 = pnand %p111, %p112
    %p114 = pneg %p113
    // Predicated region
    $region9: #{_run.1} parent=5 // pred_check
      _
    $region10: #{_run.1} parent=5 // pred_check_branch
      %116 = sbr.rel (%p113) target = $region12
    $region11: #{_run.1} parent=5 // pred_region
      %s117 = ssub.s32 %s9, 1
      // Predicated region
      $region13: #{_run.1} parent=11 // pred_check
        %p118 = pneg %p56
      $region14: #{_run.1} parent=11 // pred_check_branch
        %120 = sbr.rel (%p118) target = $region16
      $region15: #{_run.1} parent=11 // pred_region
        _
      $region16: #{_run.1} parent=11 // pred_fallthru
        _
      // Predicated region
      $region17: #{_run.1} parent=11 // pred_check
        %p121 = pneg %p77
      $region18: #{_run.1} parent=11 // pred_check_branch
        %123 = sbr.rel (%p121) target = $region20
      $region19: #{_run.1} parent=11 // pred_region
        _
      $region20: #{_run.1} parent=11 // pred_fallthru
        _
    $region12: #{_run.1} parent=5 // pred_fallthru
      _
    %p124 = scmp.lt.s32.totalorder %s9, 2
    // Predicated region
    $region21: #{_run.1} parent=5 // pred_check
      %p125 = pneg %p124
    $region22: #{_run.1} parent=5 // pred_check_branch
      %127 = sbr.rel (%p125) target = $region24
    $region23: #{_run.1} parent=5 // pred_region
      // Predicated region
      $region25: #{_run.1} parent=23 // pred_check
        %p128 = pneg %p29
      $region26: #{_run.1} parent=23 // pred_check_branch
        %130 = sbr.rel (%p128) target = $region28
      $region27: #{_run.1} parent=23 // pred_region
        %p131 = scmp.lt.s32.totalorder %s9, 1
        %s132 = scalar_select %p131, %s9, 1
        %s133 = smul.addr %s132, 4
        %s134 = smul.addr %s133, 4
        %s135 = scalar_lea.vmem %s0, %s134
      $region28: #{_run.1} parent=23 // pred_fallthru
        _
    $region24: #{_run.1} parent=5 // pred_fallthru
      _
    %p136 = scmp.le.s32.totalorder 1, %s9
    %p137 = scmp.lt.s32.totalorder %s9, 3
    %p138 = pnand %p136, %p137
    %p139 = pneg %p138
    // Predicated region
    $region29: #{_run.1} parent=5 // pred_check
      _
    $region30: #{_run.1} parent=5 // pred_check_branch
      %141 = sbr.rel (%p138) target = $region32
    $region31: #{_run.1} parent=5 // pred_region
      %s142 = ssub.s32 %s9, 1
      %p143 = scmp.lt.s32.totalorder %s14, 1
      %s144 = scalar_select %p143, %s14, 1
      %s145 = smul.addr %s144, 4
      %s146 = smul.addr %s145, 4
      %s147 = scalar_lea.vmem %s0, %s146
      %p148 = pneg %p35
      %p149 = pneg %p32
      %p150 = pneg %p56
      %p151 = pneg %p53
      %p152 = pneg %p77
      %p153 = pneg %p74
      %p154 = pneg %p103
      %p155 = pneg %p100
      %p156 = scmp.lt.s32.totalorder %s14, 1
      %s157 = scalar_select %p156, %s14, 1
      %s158 = smul.addr %s157, 3
      %s159 = smul.addr %s158, 8
      %s160 = scalar_lea.vmem %s3, %s159
      %p161 = scmp.lt.s32.totalorder %s14, 1
      %s162 = scalar_select %p161, %s14, 1
      %s163 = smul.addr %s162, 4
      %s164 = smul.addr %s163, 4
      %s165 = scalar_lea.vmem %s0, %s164
      %p166 = scmp.lt.s32.totalorder %s14, 1
      %s167 = scalar_select %p166, %s14, 1
      %s168 = smul.addr %s167, 3
      %s169 = smul.addr %s168, 8
      %s170 = scalar_lea.vmem %s3, %s169
      %v172 = vld [vmem:[%s165] sm:$0xff]
      %v173 = vld [vmem:[%s165 + $0x8] sm:$0xff]
      %v174 = vld [vmem:[%s1] sm:$0xf]
      %s175 = scalar_lea.vmem %s1, 4
      %v176 = vld [vmem:[%s175] sm:$0xf]
      %v179 = vunpack.c.l.b16 %v172
      %v180 = vunpack.c.h.b16 %v172
      %v181 = vunpack.c.l.b16 %v173
      %v182 = vunpack.c.h.b16 %v173
      %v183 = vpack.c.b16 %v179, %v179
      %v184 = vpack.c.b16 %v180, %v180
      %v185 = vpack.c.b16 %v181, %v181
      %v186 = vpack.c.b16 %v182, %v182
      %187 = vrot.lane.b32.xlu0 %v183, 127
      %v188 = vpop.permute.xlu0 %187
      %189 = vrot.lane.b32.xlu0 %v184, 127
      %v190 = vpop.permute.xlu0 %189
      %191 = vrot.lane.b32.xlu0 %v185, 127
      %v192 = vpop.permute.xlu0 %191
      %193 = vrot.lane.b32.xlu0 %v186, 127
      %v194 = vpop.permute.xlu0 %193
      %vm195 = vcmask 1039360
      %v196 = vsel %vm195, %v188, %v190
      %v197 = vsel %vm195, %v190, %v192
      %v198 = vsel %vm195, %v192, %v194
      %vm199 = vcmask 64512
      %v201 = vsel %vm199, %v176, 0
      %vm203 = vcmask 1043456
      %v205 = vsel %vm203, %v196, 0
      %v208 = vsel %vm203, %v197, 0
      %v211 = vsel %vm203, %v198, 0
      %213 = vmatprep.subr.bf16.mxu0 %v208
      %214 = vmatpush1.bf16.msra.mxu0 %v205
      %215 = vmatprep.subr.bf16.mxu0 0
      %216 = vmatpush1.bf16.msra.mxu0 0
      %217 = vmatprep.subr.bf16.mxu0 0
      %218 = vmatpush1.bf16.msra.mxu0 0
      %219 = vmatprep.subr.bf16.mxu0 0
      %220 = vmatpush1.bf16.msra.mxu0 0
      %221 = vmatprep.subr.bf16.mxu0 0
      %222 = vmatpush1.bf16.msra.mxu0 0
      %223 = vmatprep.subr.bf16.mxu0 0
      %224 = vmatpush1.bf16.msra.mxu0 0
      %225 = vmatprep.subr.bf16.mxu0 0
      %226 = vmatpush1.bf16.msra.mxu0 0
      %227 = vmatprep.subr.bf16.mxu0 0
      %228 = vmatpush1.bf16.msra.mxu0 0
      %229 = vmatprep.subr.bf16.mxu0 0
      %230 = vmatpush1.bf16.msra.mxu0 0
      %231 = vmatprep.subr.bf16.mxu0 0
      %232 = vmatpush1.bf16.msra.mxu0 0
      %233 = vmatprep.subr.bf16.mxu0 0
      %234 = vmatpush1.bf16.msra.mxu0 0
      %235 = vmatprep.subr.bf16.mxu0 0
      %236 = vmatpush1.bf16.msra.mxu0 0
      %237 = vmatprep.subr.bf16.mxu0 0
      %238 = vmatpush1.bf16.msra.mxu0 0
      %239 = vmatprep.subr.bf16.mxu0 0
      %240 = vmatpush1.bf16.msra.mxu0 0
      %241 = vmatprep.subr.bf16.mxu0 0
      %242 = vmatpush1.bf16.msra.mxu0 0
      %243 = vmatprep.subr.bf16.mxu0 0
      %244 = vmatpush1.bf16.msra.mxu0 0
      %245 = vmatprep.mubr.bf16.mxu0 0
      %246 = vmatmul.mubr.bf16.gmra.mrb[0].mxu0 %v201
      %v247 = vpop.f32.mrb[0].mxu0
      %v248 = vadd.f32 0.0, %v247
      %v249 = vpop.f32.mrb[0].mxu0
      %v250 = vadd.f32 0.0, %v249
      %v251 = vpop.f32.mrb[0].mxu0
      %v252 = vpop.f32.mrb[0].mxu0
      %253 = vdwg.mxu0
      %254 = vmatprep.subr.bf16.mxu0 0
      %255 = vmatpush1.bf16.msra.mxu0 %v211
      %256 = vmatprep.subr.bf16.mxu0 0
      %257 = vmatpush1.bf16.msra.mxu0 0
      %258 = vmatprep.subr.bf16.mxu0 0
      %259 = vmatpush1.bf16.msra.mxu0 0
      %260 = vmatprep.subr.bf16.mxu0 0
      %261 = vmatpush1.bf16.msra.mxu0 0
      %262 = vmatprep.subr.bf16.mxu0 0
      %263 = vmatpush1.bf16.msra.mxu0 0
      %264 = vmatprep.subr.bf16.mxu0 0
      %265 = vmatpush1.bf16.msra.mxu0 0
      %266 = vmatprep.subr.bf16.mxu0 0
      %267 = vmatpush1.bf16.msra.mxu0 0
      %268 = vmatprep.subr.bf16.mxu0 0
      %269 = vmatpush1.bf16.msra.mxu0 0
      %270 = vmatprep.subr.bf16.mxu0 0
      %271 = vmatpush1.bf16.msra.mxu0 0
      %272 = vmatprep.subr.bf16.mxu0 0
      %273 = vmatpush1.bf16.msra.mxu0 0
      %274 = vmatprep.subr.bf16.mxu0 0
      %275 = vmatpush1.bf16.msra.mxu0 0
      %276 = vmatprep.subr.bf16.mxu0 0
      %277 = vmatpush1.bf16.msra.mxu0 0
      %278 = vmatprep.subr.bf16.mxu0 0
      %279 = vmatpush1.bf16.msra.mxu0 0
      %280 = vmatprep.subr.bf16.mxu0 0
      %281 = vmatpush1.bf16.msra.mxu0 0
      %282 = vmatprep.subr.bf16.mxu0 0
      %283 = vmatpush1.bf16.msra.mxu0 0
      %284 = vmatprep.subr.bf16.mxu0 0
      %285 = vmatpush1.bf16.msra.mxu0 0
      %286 = vmatprep.mubr.bf16.mxu0 0
      %287 = vmatmul.mubr.bf16.gmra.mrb[0].mxu0 %v201
      %v288 = vpop.f32.mrb[0].mxu0
      %v289 = vadd.f32 0.0, %v288
      %v290 = vpop.f32.mrb[0].mxu0
      %v291 = vpop.f32.mrb[0].mxu0
      %v292 = vpop.f32.mrb[0].mxu0
      %293 = vdwg.mxu0
      %v295 = vsel %vm199, %v174, 0
      %v298 = vsel %vm203, %v183, 0
      %v301 = vsel %vm203, %v184, 0
      %v304 = vsel %vm203, %v185, 0
      %306 = vmatprep.subr.bf16.mxu0 %v301
      %307 = vmatpush1.bf16.msra.mxu0 %v298
      %308 = vmatprep.subr.bf16.mxu0 0
      %309 = vmatpush1.bf16.msra.mxu0 0
      %310 = vmatprep.subr.bf16.mxu0 0
      %311 = vmatpush1.bf16.msra.mxu0 0
      %312 = vmatprep.subr.bf16.mxu0 0
      %313 = vmatpush1.bf16.msra.mxu0 0
      %314 = vmatprep.subr.bf16.mxu0 0
      %315 = vmatpush1.bf16.msra.mxu0 0
      %316 = vmatprep.subr.bf16.mxu0 0
      %317 = vmatpush1.bf16.msra.mxu0 0
      %318 = vmatprep.subr.bf16.mxu0 0
      %319 = vmatpush1.bf16.msra.mxu0 0
      %320 = vmatprep.subr.bf16.mxu0 0
      %321 = vmatpush1.bf16.msra.mxu0 0
      %322 = vmatprep.subr.bf16.mxu0 0
      %323 = vmatpush1.bf16.msra.mxu0 0
      %324 = vmatprep.subr.bf16.mxu0 0
      %325 = vmatpush1.bf16.msra.mxu0 0
      %326 = vmatprep.subr.bf16.mxu0 0
      %327 = vmatpush1.bf16.msra.mxu0 0
      %328 = vmatprep.subr.bf16.mxu0 0
      %329 = vmatpush1.bf16.msra.mxu0 0
      %330 = vmatprep.subr.bf16.mxu0 0
      %331 = vmatpush1.bf16.msra.mxu0 0
      %332 = vmatprep.subr.bf16.mxu0 0
      %333 = vmatpush1.bf16.msra.mxu0 0
      %334 = vmatprep.subr.bf16.mxu0 0
      %335 = vmatpush1.bf16.msra.mxu0 0
      %336 = vmatprep.subr.bf16.mxu0 0
      %337 = vmatpush1.bf16.msra.mxu0 0
      %338 = vmatprep.mubr.bf16.mxu0 0
      %339 = vmatmul.mubr.bf16.gmra.mrb[0].mxu0 %v295
      %v340 = vpop.f32.mrb[0].mxu0
      %v341 = vadd.f32 %v248, %v340
      %v342 = vpop.f32.mrb[0].mxu0
      %v343 = vadd.f32 %v250, %v342
      %v344 = vpop.f32.mrb[0].mxu0
      %v345 = vpop.f32.mrb[0].mxu0
      %346 = vdwg.mxu0
      %347 = vmatprep.subr.bf16.mxu0 0
      %348 = vmatpush1.bf16.msra.mxu0 %v304
      %349 = vmatprep.subr.bf16.mxu0 0
      %350 = vmatpush1.bf16.msra.mxu0 0
      %351 = vmatprep.subr.bf16.mxu0 0
      %352 = vmatpush1.bf16.msra.mxu0 0
      %353 = vmatprep.subr.bf16.mxu0 0
      %354 = vmatpush1.bf16.msra.mxu0 0
      %355 = vmatprep.subr.bf16.mxu0 0
      %356 = vmatpush1.bf16.msra.mxu0 0
      %357 = vmatprep.subr.bf16.mxu0 0
      %358 = vmatpush1.bf16.msra.mxu0 0
      %359 = vmatprep.subr.bf16.mxu0 0
      %360 = vmatpush1.bf16.msra.mxu0 0
      %361 = vmatprep.subr.bf16.mxu0 0
      %362 = vmatpush1.bf16.msra.mxu0 0
      %363 = vmatprep.subr.bf16.mxu0 0
      %364 = vmatpush1.bf16.msra.mxu0 0
      %365 = vmatprep.subr.bf16.mxu0 0
      %366 = vmatpush1.bf16.msra.mxu0 0
      %367 = vmatprep.subr.bf16.mxu0 0
      %368 = vmatpush1.bf16.msra.mxu0 0
      %369 = vmatprep.subr.bf16.mxu0 0
      %370 = vmatpush1.bf16.msra.mxu0 0
      %371 = vmatprep.subr.bf16.mxu0 0
      %372 = vmatpush1.bf16.msra.mxu0 0
      %373 = vmatprep.subr.bf16.mxu0 0
      %374 = vmatpush1.bf16.msra.mxu0 0
      %375 = vmatprep.subr.bf16.mxu0 0
      %376 = vmatpush1.bf16.msra.mxu0 0
      %377 = vmatprep.subr.bf16.mxu0 0
      %378 = vmatpush1.bf16.msra.mxu0 0
      %379 = vmatprep.mubr.bf16.mxu0 0
      %380 = vmatmul.mubr.bf16.gmra.mrb[0].mxu0 %v295
      %v381 = vpop.f32.mrb[0].mxu0
      %v382 = vadd.f32 %v289, %v381
      %v383 = vpop.f32.mrb[0].mxu0
      %v384 = vpop.f32.mrb[0].mxu0
      %v385 = vpop.f32.mrb[0].mxu0
      %386 = vdwg.mxu0
      %s387 = scalar_lea.vmem %s1, 8
      %v388 = vld [vmem:[%s387] sm:$0xf]
      %389 = vrot.lane.b32.xlu0 %v183, 126
      %v390 = vpop.permute.xlu0 %389
      %391 = vrot.lane.b32.xlu0 %v184, 126
      %v392 = vpop.permute.xlu0 %391
      %393 = vrot.lane.b32.xlu0 %v185, 126
      %v394 = vpop.permute.xlu0 %393
      %395 = vrot.lane.b32.xlu0 %v186, 126
      %v396 = vpop.permute.xlu0 %395
      %vm397 = vcmask 1031168
      %v398 = vsel %vm397, %v390, %v392
      %v399 = vsel %vm397, %v392, %v394
      %v400 = vsel %vm397, %v394, %v396
      %v402 = vsel %vm199, %v388, 0
      %v405 = vsel %vm203, %v398, 0
      %v408 = vsel %vm203, %v399, 0
      %v411 = vsel %vm203, %v400, 0
      %413 = vmatprep.subr.bf16.mxu0 %v408
      %414 = vmatpush1.bf16.msra.mxu0 %v405
      %415 = vmatprep.subr.bf16.mxu0 0
      %416 = vmatpush1.bf16.msra.mxu0 0
      %417 = vmatprep.subr.bf16.mxu0 0
      %418 = vmatpush1.bf16.msra.mxu0 0
      %419 = vmatprep.subr.bf16.mxu0 0
      %420 = vmatpush1.bf16.msra.mxu0 0
      %421 = vmatprep.subr.bf16.mxu0 0
      %422 = vmatpush1.bf16.msra.mxu0 0
      %423 = vmatprep.subr.bf16.mxu0 0
      %424 = vmatpush1.bf16.msra.mxu0 0
      %425 = vmatprep.subr.bf16.mxu0 0
      %426 = vmatpush1.bf16.msra.mxu0 0
      %427 = vmatprep.subr.bf16.mxu0 0
      %428 = vmatpush1.bf16.msra.mxu0 0
      %429 = vmatprep.subr.bf16.mxu0 0
      %430 = vmatpush1.bf16.msra.mxu0 0
      %431 = vmatprep.subr.bf16.mxu0 0
      %432 = vmatpush1.bf16.msra.mxu0 0
      %433 = vmatprep.subr.bf16.mxu0 0
      %434 = vmatpush1.bf16.msra.mxu0 0
      %435 = vmatprep.subr.bf16.mxu0 0
      %436 = vmatpush1.bf16.msra.mxu0 0
      %437 = vmatprep.subr.bf16.mxu0 0
      %438 = vmatpush1.bf16.msra.mxu0 0
      %439 = vmatprep.subr.bf16.mxu0 0
      %440 = vmatpush1.bf16.msra.mxu0 0
      %441 = vmatprep.subr.bf16.mxu0 0
      %442 = vmatpush1.bf16.msra.mxu0 0
      %443 = vmatprep.subr.bf16.mxu0 0
      %444 = vmatpush1.bf16.msra.mxu0 0
      %445 = vmatprep.mubr.bf16.mxu0 0
      %446 = vmatmul.mubr.bf16.gmra.mrb[0].mxu0 %v402
      %v447 = vpop.f32.mrb[0].mxu0
      %v448 = vadd.f32 0.0, %v447
      %v449 = vpop.f32.mrb[0].mxu0
      %v450 = vadd.f32 0.0, %v449
      %v451 = vpop.f32.mrb[0].mxu0
      %v452 = vpop.f32.mrb[0].mxu0
      %453 = vdwg.mxu0
      %454 = vmatprep.subr.bf16.mxu0 0
      %455 = vmatpush1.bf16.msra.mxu0 %v411
      %456 = vmatprep.subr.bf16.mxu0 0
      %457 = vmatpush1.bf16.msra.mxu0 0
      %458 = vmatprep.subr.bf16.mxu0 0
      %459 = vmatpush1.bf16.msra.mxu0 0
      %460 = vmatprep.subr.bf16.mxu0 0
      %461 = vmatpush1.bf16.msra.mxu0 0
      %462 = vmatprep.subr.bf16.mxu0 0
      %463 = vmatpush1.bf16.msra.mxu0 0
      %464 = vmatprep.subr.bf16.mxu0 0
      %465 = vmatpush1.bf16.msra.mxu0 0
      %466 = vmatprep.subr.bf16.mxu0 0
      %467 = vmatpush1.bf16.msra.mxu0 0
      %468 = vmatprep.subr.bf16.mxu0 0
      %469 = vmatpush1.bf16.msra.mxu0 0
      %470 = vmatprep.subr.bf16.mxu0 0
      %471 = vmatpush1.bf16.msra.mxu0 0
      %472 = vmatprep.subr.bf16.mxu0 0
      %473 = vmatpush1.bf16.msra.mxu0 0
      %474 = vmatprep.subr.bf16.mxu0 0
      %475 = vmatpush1.bf16.msra.mxu0 0
      %476 = vmatprep.subr.bf16.mxu0 0
      %477 = vmatpush1.bf16.msra.mxu0 0
      %478 = vmatprep.subr.bf16.mxu0 0
      %479 = vmatpush1.bf16.msra.mxu0 0
      %480 = vmatprep.subr.bf16.mxu0 0
      %481 = vmatpush1.bf16.msra.mxu0 0
      %482 = vmatprep.subr.bf16.mxu0 0
      %483 = vmatpush1.bf16.msra.mxu0 0
      %484 = vmatprep.subr.bf16.mxu0 0
      %485 = vmatpush1.bf16.msra.mxu0 0
      %486 = vmatprep.mubr.bf16.mxu0 0
      %487 = vmatmul.mubr.bf16.gmra.mrb[0].mxu0 %v402
      %v488 = vpop.f32.mrb[0].mxu0
      %v489 = vadd.f32 0.0, %v488
      %v490 = vpop.f32.mrb[0].mxu0
      %v491 = vpop.f32.mrb[0].mxu0
      %v492 = vpop.f32.mrb[0].mxu0
      %493 = vdwg.mxu0
      %v494 = vadd.f32 %v341, %v448
      %v495 = vadd.f32 %v343, %v450
      %v496 = vadd.f32 %v382, %v489
      %s497 = scalar_lea.vmem %s1, 12
      %v498 = vld [vmem:[%s497] sm:$0xf]
      %499 = vrot.lane.b32.xlu0 %v183, 110
      %v500 = vpop.permute.xlu0 %499
      %501 = vrot.lane.b32.xlu0 %v184, 110
      %v502 = vpop.permute.xlu0 %501
      %503 = vrot.lane.b32.xlu0 %v185, 110
      %v504 = vpop.permute.xlu0 %503
      %505 = vrot.lane.b32.xlu0 %v186, 110
      %v506 = vpop.permute.xlu0 %505
      %vm507 = vcmask 900096
      %v508 = vsel %vm507, %v500, %v502
      %v509 = vsel %vm507, %v502, %v504
      %v510 = vsel %vm507, %v504, %v506
      %v512 = vsel %vm199, %v498, 0
      %v515 = vsel %vm203, %v508, 0
      %v518 = vsel %vm203, %v509, 0
      %v521 = vsel %vm203, %v510, 0
      %523 = vmatprep.subr.bf16.mxu0 %v518
      %524 = vmatpush1.bf16.msra.mxu0 %v515
      %525 = vmatprep.subr.bf16.mxu0 0
      %526 = vmatpush1.bf16.msra.mxu0 0
      %527 = vmatprep.subr.bf16.mxu0 0
      %528 = vmatpush1.bf16.msra.mxu0 0
      %529 = vmatprep.subr.bf16.mxu0 0
      %530 = vmatpush1.bf16.msra.mxu0 0
      %531 = vmatprep.subr.bf16.mxu0 0
      %532 = vmatpush1.bf16.msra.mxu0 0
      %533 = vmatprep.subr.bf16.mxu0 0
      %534 = vmatpush1.bf16.msra.mxu0 0
      %535 = vmatprep.subr.bf16.mxu0 0
      %536 = vmatpush1.bf16.msra.mxu0 0
      %537 = vmatprep.subr.bf16.mxu0 0
      %538 = vmatpush1.bf16.msra.mxu0 0
      %539 = vmatprep.subr.bf16.mxu0 0
      %540 = vmatpush1.bf16.msra.mxu0 0
      %541 = vmatprep.subr.bf16.mxu0 0
      %542 = vmatpush1.bf16.msra.mxu0 0
      %543 = vmatprep.subr.bf16.mxu0 0
      %544 = vmatpush1.bf16.msra.mxu0 0
      %545 = vmatprep.subr.bf16.mxu0 0
      %546 = vmatpush1.bf16.msra.mxu0 0
      %547 = vmatprep.subr.bf16.mxu0 0
      %548 = vmatpush1.bf16.msra.mxu0 0
      %549 = vmatprep.subr.bf16.mxu0 0
      %550 = vmatpush1.bf16.msra.mxu0 0
      %551 = vmatprep.subr.bf16.mxu0 0
      %552 = vmatpush1.bf16.msra.mxu0 0
      %553 = vmatprep.subr.bf16.mxu0 0
      %554 = vmatpush1.bf16.msra.mxu0 0
      %555 = vmatprep.mubr.bf16.mxu0 0
      %556 = vmatmul.mubr.bf16.gmra.mrb[0].mxu0 %v512
      %v557 = vpop.f32.mrb[0].mxu0
      %v558 = vadd.f32 0.0, %v557
      %v559 = vpop.f32.mrb[0].mxu0
      %v560 = vadd.f32 0.0, %v559
      %v561 = vpop.f32.mrb[0].mxu0
      %v562 = vpop.f32.mrb[0].mxu0
      %563 = vdwg.mxu0
      %564 = vmatprep.subr.bf16.mxu0 0
      %565 = vmatpush1.bf16.msra.mxu0 %v521
      %566 = vmatprep.subr.bf16.mxu0 0
      %567 = vmatpush1.bf16.msra.mxu0 0
      %568 = vmatprep.subr.bf16.mxu0 0
      %569 = vmatpush1.bf16.msra.mxu0 0
      %570 = vmatprep.subr.bf16.mxu0 0
      %571 = vmatpush1.bf16.msra.mxu0 0
      %572 = vmatprep.subr.bf16.mxu0 0
      %573 = vmatpush1.bf16.msra.mxu0 0
      %574 = vmatprep.subr.bf16.mxu0 0
      %575 = vmatpush1.bf16.msra.mxu0 0
      %576 = vmatprep.subr.bf16.mxu0 0
      %577 = vmatpush1.bf16.msra.mxu0 0
      %578 = vmatprep.subr.bf16.mxu0 0
      %579 = vmatpush1.bf16.msra.mxu0 0
      %580 = vmatprep.subr.bf16.mxu0 0
      %581 = vmatpush1.bf16.msra.mxu0 0
      %582 = vmatprep.subr.bf16.mxu0 0
      %583 = vmatpush1.bf16.msra.mxu0 0
      %584 = vmatprep.subr.bf16.mxu0 0
      %585 = vmatpush1.bf16.msra.mxu0 0
      %586 = vmatprep.subr.bf16.mxu0 0
      %587 = vmatpush1.bf16.msra.mxu0 0
      %588 = vmatprep.subr.bf16.mxu0 0
      %589 = vmatpush1.bf16.msra.mxu0 0
      %590 = vmatprep.subr.bf16.mxu0 0
      %591 = vmatpush1.bf16.msra.mxu0 0
      %592 = vmatprep.subr.bf16.mxu0 0
      %593 = vmatpush1.bf16.msra.mxu0 0
      %594 = vmatprep.subr.bf16.mxu0 0
      %595 = vmatpush1.bf16.msra.mxu0 0
      %596 = vmatprep.mubr.bf16.mxu0 0
      %597 = vmatmul.mubr.bf16.gmra.mrb[0].mxu0 %v512
      %v598 = vpop.f32.mrb[0].mxu0
      %v599 = vadd.f32 0.0, %v598
      %v600 = vpop.f32.mrb[0].mxu0
      %v601 = vpop.f32.mrb[0].mxu0
      %v602 = vpop.f32.mrb[0].mxu0
      %603 = vdwg.mxu0
      %v604 = vadd.f32 %v494, %v558
      %v605 = vadd.f32 %v495, %v560
      %v606 = vadd.f32 %v496, %v599
      %s607 = scalar_lea.vmem %s1, 16
      %v608 = vld [vmem:[%s607] sm:$0xf]
      %609 = vrot.lane.b32.xlu0 %v183, 109
      %v610 = vpop.permute.xlu0 %609
      %611 = vrot.lane.b32.xlu0 %v184, 109
      %v612 = vpop.permute.xlu0 %611
      %613 = vrot.lane.b32.xlu0 %v185, 109
      %v614 = vpop.permute.xlu0 %613
      %615 = vrot.lane.b32.xlu0 %v186, 109
      %v616 = vpop.permute.xlu0 %615
      %vm617 = vcmask 891904
      %v618 = vsel %vm617, %v610, %v612
      %v619 = vsel %vm617, %v612, %v614
      %v620 = vsel %vm617, %v614, %v616
      %v622 = vsel %vm199, %v608, 0
      %v625 = vsel %vm203, %v618, 0
      %v628 = vsel %vm203, %v619, 0
      %v631 = vsel %vm203, %v620, 0
      %633 = vmatprep.subr.bf16.mxu0 %v628
      %634 = vmatpush1.bf16.msra.mxu0 %v625
      %635 = vmatprep.subr.bf16.mxu0 0
      %636 = vmatpush1.bf16.msra.mxu0 0
      %637 = vmatprep.subr.bf16.mxu0 0
      %638 = vmatpush1.bf16.msra.mxu0 0
      %639 = vmatprep.subr.bf16.mxu0 0
      %640 = vmatpush1.bf16.msra.mxu0 0
      %641 = vmatprep.subr.bf16.mxu0 0
      %642 = vmatpush1.bf16.msra.mxu0 0
      %643 = vmatprep.subr.bf16.mxu0 0
      %644 = vmatpush1.bf16.msra.mxu0 0
      %645 = vmatprep.subr.bf16.mxu0 0
      %646 = vmatpush1.bf16.msra.mxu0 0
      %647 = vmatprep.subr.bf16.mxu0 0
      %648 = vmatpush1.bf16.msra.mxu0 0
      %649 = vmatprep.subr.bf16.mxu0 0
      %650 = vmatpush1.bf16.msra.mxu0 0
      %651 = vmatprep.subr.bf16.mxu0 0
      %652 = vmatpush1.bf16.msra.mxu0 0
      %653 = vmatprep.subr.bf16.mxu0 0
      %654 = vmatpush1.bf16.msra.mxu0 0
      %655 = vmatprep.subr.bf16.mxu0 0
      %656 = vmatpush1.bf16.msra.mxu0 0
      %657 = vmatprep.subr.bf16.mxu0 0
      %658 = vmatpush1.bf16.msra.mxu0 0
      %659 = vmatprep.subr.bf16.mxu0 0
      %660 = vmatpush1.bf16.msra.mxu0 0
      %661 = vmatprep.subr.bf16.mxu0 0
      %662 = vmatpush1.bf16.msra.mxu0 0
      %663 = vmatprep.subr.bf16.mxu0 0
      %664 = vmatpush1.bf16.msra.mxu0 0
      %665 = vmatprep.mubr.bf16.mxu0 0
      %666 = vmatmul.mubr.bf16.gmra.mrb[0].mxu0 %v622
      %v667 = vpop.f32.mrb[0].mxu0
      %v668 = vadd.f32 0.0, %v667
      %v669 = vpop.f32.mrb[0].mxu0
      %v670 = vadd.f32 0.0, %v669
      %v671 = vpop.f32.mrb[0].mxu0
      %v672 = vpop.f32.mrb[0].mxu0
      %673 = vdwg.mxu0
      %674 = vmatprep.subr.bf16.mxu0 0
      %675 = vmatpush1.bf16.msra.mxu0 %v631
      %676 = vmatprep.subr.bf16.mxu0 0
      %677 = vmatpush1.bf16.msra.mxu0 0
      %678 = vmatprep.subr.bf16.mxu0 0
      %679 = vmatpush1.bf16.msra.mxu0 0
      %680 = vmatprep.subr.bf16.mxu0 0
      %681 = vmatpush1.bf16.msra.mxu0 0
      %682 = vmatprep.subr.bf16.mxu0 0
      %683 = vmatpush1.bf16.msra.mxu0 0
      %684 = vmatprep.subr.bf16.mxu0 0
      %685 = vmatpush1.bf16.msra.mxu0 0
      %686 = vmatprep.subr.bf16.mxu0 0
      %687 = vmatpush1.bf16.msra.mxu0 0
      %688 = vmatprep.subr.bf16.mxu0 0
      %689 = vmatpush1.bf16.msra.mxu0 0
      %690 = vmatprep.subr.bf16.mxu0 0
      %691 = vmatpush1.bf16.msra.mxu0 0
      %692 = vmatprep.subr.bf16.mxu0 0
      %693 = vmatpush1.bf16.msra.mxu0 0
      %694 = vmatprep.subr.bf16.mxu0 0
      %695 = vmatpush1.bf16.msra.mxu0 0
      %696 = vmatprep.subr.bf16.mxu0 0
      %697 = vmatpush1.bf16.msra.mxu0 0
      %698 = vmatprep.subr.bf16.mxu0 0
      %699 = vmatpush1.bf16.msra.mxu0 0
      %700 = vmatprep.subr.bf16.mxu0 0
      %701 = vmatpush1.bf16.msra.mxu0 0
      %702 = vmatprep.subr.bf16.mxu0 0
      %703 = vmatpush1.bf16.msra.mxu0 0
      %704 = vmatprep.subr.bf16.mxu0 0
      %705 = vmatpush1.bf16.msra.mxu0 0
      %706 = vmatprep.mubr.bf16.mxu0 0
      %707 = vmatmul.mubr.bf16.gmra.mrb[0].mxu0 %v622
      %v708 = vpop.f32.mrb[0].mxu0
      %v709 = vadd.f32 0.0, %v708
      %v710 = vpop.f32.mrb[0].mxu0
      %v711 = vpop.f32.mrb[0].mxu0
      %v712 = vpop.f32.mrb[0].mxu0
      %713 = vdwg.mxu0
      %v714 = vadd.f32 %v604, %v668
      %v715 = vadd.f32 %v605, %v670
      %v716 = vadd.f32 %v606, %v709
      %s717 = scalar_lea.vmem %s1, 20
      %v718 = vld [vmem:[%s717] sm:$0xf]
      %719 = vrot.lane.b32.xlu0 %v183, 108
      %v720 = vpop.permute.xlu0 %719
      %721 = vrot.lane.b32.xlu0 %v184, 108
      %v722 = vpop.permute.xlu0 %721
      %723 = vrot.lane.b32.xlu0 %v185, 108
      %v724 = vpop.permute.xlu0 %723
      %725 = vrot.lane.b32.xlu0 %v186, 108
      %v726 = vpop.permute.xlu0 %725
      %vm727 = vcmask 883712
      %v728 = vsel %vm727, %v720, %v722
      %v729 = vsel %vm727, %v722, %v724
      %v730 = vsel %vm727, %v724, %v726
      %v732 = vsel %vm199, %v718, 0
      %v735 = vsel %vm203, %v728, 0
      %v738 = vsel %vm203, %v729, 0
      %v741 = vsel %vm203, %v730, 0
      %743 = vmatprep.subr.bf16.mxu0 %v738
      %744 = vmatpush1.bf16.msra.mxu0 %v735
      %745 = vmatprep.subr.bf16.mxu0 0
      %746 = vmatpush1.bf16.msra.mxu0 0
      %747 = vmatprep.subr.bf16.mxu0 0
      %748 = vmatpush1.bf16.msra.mxu0 0
      %749 = vmatprep.subr.bf16.mxu0 0
      %750 = vmatpush1.bf16.msra.mxu0 0
      %751 = vmatprep.subr.bf16.mxu0 0
      %752 = vmatpush1.bf16.msra.mxu0 0
      %753 = vmatprep.subr.bf16.mxu0 0
      %754 = vmatpush1.bf16.msra.mxu0 0
      %755 = vmatprep.subr.bf16.mxu0 0
      %756 = vmatpush1.bf16.msra.mxu0 0
      %757 = vmatprep.subr.bf16.mxu0 0
      %758 = vmatpush1.bf16.msra.mxu0 0
      %759 = vmatprep.subr.bf16.mxu0 0
      %760 = vmatpush1.bf16.msra.mxu0 0
      %761 = vmatprep.subr.bf16.mxu0 0
      %762 = vmatpush1.bf16.msra.mxu0 0
      %763 = vmatprep.subr.bf16.mxu0 0
      %764 = vmatpush1.bf16.msra.mxu0 0
      %765 = vmatprep.subr.bf16.mxu0 0
      %766 = vmatpush1.bf16.msra.mxu0 0
      %767 = vmatprep.subr.bf16.mxu0 0
      %768 = vmatpush1.bf16.msra.mxu0 0
      %769 = vmatprep.subr.bf16.mxu0 0
      %770 = vmatpush1.bf16.msra.mxu0 0
      %771 = vmatprep.subr.bf16.mxu0 0
      %772 = vmatpush1.bf16.msra.mxu0 0
      %773 = vmatprep.subr.bf16.mxu0 0
      %774 = vmatpush1.bf16.msra.mxu0 0
      %775 = vmatprep.mubr.bf16.mxu0 0
      %776 = vmatmul.mubr.bf16.gmra.mrb[0].mxu0 %v732
      %v777 = vpop.f32.mrb[0].mxu0
      %v778 = vadd.f32 0.0, %v777
      %v779 = vpop.f32.mrb[0].mxu0
      %v780 = vadd.f32 0.0, %v779
      %v781 = vpop.f32.mrb[0].mxu0
      %v782 = vpop.f32.mrb[0].mxu0
      %783 = vdwg.mxu0
      %784 = vmatprep.subr.bf16.mxu0 0
      %785 = vmatpush1.bf16.msra.mxu0 %v741
      %786 = vmatprep.subr.bf16.mxu0 0
      %787 = vmatpush1.bf16.msra.mxu0 0
      %788 = vmatprep.subr.bf16.mxu0 0
      %789 = vmatpush1.bf16.msra.mxu0 0
      %790 = vmatprep.subr.bf16.mxu0 0
      %791 = vmatpush1.bf16.msra.mxu0 0
      %792 = vmatprep.subr.bf16.mxu0 0
      %793 = vmatpush1.bf16.msra.mxu0 0
      %794 = vmatprep.subr.bf16.mxu0 0
      %795 = vmatpush1.bf16.msra.mxu0 0
      %796 = vmatprep.subr.bf16.mxu0 0
      %797 = vmatpush1.bf16.msra.mxu0 0
      %798 = vmatprep.subr.bf16.mxu0 0
      %799 = vmatpush1.bf16.msra.mxu0 0
      %800 = vmatprep.subr.bf16.mxu0 0
      %801 = vmatpush1.bf16.msra.mxu0 0
      %802 = vmatprep.subr.bf16.mxu0 0
      %803 = vmatpush1.bf16.msra.mxu0 0
      %804 = vmatprep.subr.bf16.mxu0 0
      %805 = vmatpush1.bf16.msra.mxu0 0
      %806 = vmatprep.subr.bf16.mxu0 0
      %807 = vmatpush1.bf16.msra.mxu0 0
      %808 = vmatprep.subr.bf16.mxu0 0
      %809 = vmatpush1.bf16.msra.mxu0 0
      %810 = vmatprep.subr.bf16.mxu0 0
      %811 = vmatpush1.bf16.msra.mxu0 0
      %812 = vmatprep.subr.bf16.mxu0 0
      %813 = vmatpush1.bf16.msra.mxu0 0
      %814 = vmatprep.subr.bf16.mxu0 0
      %815 = vmatpush1.bf16.msra.mxu0 0
      %816 = vmatprep.mubr.bf16.mxu0 0
      %817 = vmatmul.mubr.bf16.gmra.mrb[0].mxu0 %v732
      %v818 = vpop.f32.mrb[0].mxu0
      %v819 = vadd.f32 0.0, %v818
      %v820 = vpop.f32.mrb[0].mxu0
      %v821 = vpop.f32.mrb[0].mxu0
      %v822 = vpop.f32.mrb[0].mxu0
      %823 = vdwg.mxu0
      %v824 = vadd.f32 %v714, %v778
      %v825 = vadd.f32 %v715, %v780
      %v826 = vadd.f32 %v716, %v819
      %s827 = scalar_lea.vmem %s1, 24
      %v828 = vld [vmem:[%s827] sm:$0xf]
      %829 = vrot.lane.b32.xlu0 %v183, 92
      %v830 = vpop.permute.xlu0 %829
      %831 = vrot.lane.b32.xlu0 %v184, 92
      %v832 = vpop.permute.xlu0 %831
      %833 = vrot.lane.b32.xlu0 %v185, 92
      %v834 = vpop.permute.xlu0 %833
      %835 = vrot.lane.b32.xlu0 %v186, 92
      %v836 = vpop.permute.xlu0 %835
      %vm837 = vcmask 752640
      %v838 = vsel %vm837, %v830, %v832
      %v839 = vsel %vm837, %v832, %v834
      %v840 = vsel %vm837, %v834, %v836
      %v842 = vsel %vm199, %v828, 0
      %v845 = vsel %vm203, %v838, 0
      %v848 = vsel %vm203, %v839, 0
      %v851 = vsel %vm203, %v840, 0
      %853 = vmatprep.subr.bf16.mxu0 %v848
      %854 = vmatpush1.bf16.msra.mxu0 %v845
      %855 = vmatprep.subr.bf16.mxu0 0
      %856 = vmatpush1.bf16.msra.mxu0 0
      %857 = vmatprep.subr.bf16.mxu0 0
      %858 = vmatpush1.bf16.msra.mxu0 0
      %859 = vmatprep.subr.bf16.mxu0 0
      %860 = vmatpush1.bf16.msra.mxu0 0
      %861 = vmatprep.subr.bf16.mxu0 0
      %862 = vmatpush1.bf16.msra.mxu0 0
      %863 = vmatprep.subr.bf16.mxu0 0
      %864 = vmatpush1.bf16.msra.mxu0 0
      %865 = vmatprep.subr.bf16.mxu0 0
      %866 = vmatpush1.bf16.msra.mxu0 0
      %867 = vmatprep.subr.bf16.mxu0 0
      %868 = vmatpush1.bf16.msra.mxu0 0
      %869 = vmatprep.subr.bf16.mxu0 0
      %870 = vmatpush1.bf16.msra.mxu0 0
      %871 = vmatprep.subr.bf16.mxu0 0
      %872 = vmatpush1.bf16.msra.mxu0 0
      %873 = vmatprep.subr.bf16.mxu0 0
      %874 = vmatpush1.bf16.msra.mxu0 0
      %875 = vmatprep.subr.bf16.mxu0 0
      %876 = vmatpush1.bf16.msra.mxu0 0
      %877 = vmatprep.subr.bf16.mxu0 0
      %878 = vmatpush1.bf16.msra.mxu0 0
      %879 = vmatprep.subr.bf16.mxu0 0
      %880 = vmatpush1.bf16.msra.mxu0 0
      %881 = vmatprep.subr.bf16.mxu0 0
      %882 = vmatpush1.bf16.msra.mxu0 0
      %883 = vmatprep.subr.bf16.mxu0 0
      %884 = vmatpush1.bf16.msra.mxu0 0
      %885 = vmatprep.mubr.bf16.mxu0 0
      %886 = vmatmul.mubr.bf16.gmra.mrb[0].mxu0 %v842
      %v887 = vpop.f32.mrb[0].mxu0
      %v888 = vadd.f32 0.0, %v887
      %v889 = vpop.f32.mrb[0].mxu0
      %v890 = vadd.f32 0.0, %v889
      %v891 = vpop.f32.mrb[0].mxu0
      %v892 = vpop.f32.mrb[0].mxu0
      %893 = vdwg.mxu0
      %894 = vmatprep.subr.bf16.mxu0 0
      %895 = vmatpush1.bf16.msra.mxu0 %v851
      %896 = vmatprep.subr.bf16.mxu0 0
      %897 = vmatpush1.bf16.msra.mxu0 0
      %898 = vmatprep.subr.bf16.mxu0 0
      %899 = vmatpush1.bf16.msra.mxu0 0
      %900 = vmatprep.subr.bf16.mxu0 0
      %901 = vmatpush1.bf16.msra.mxu0 0
      %902 = vmatprep.subr.bf16.mxu0 0
      %903 = vmatpush1.bf16.msra.mxu0 0
      %904 = vmatprep.subr.bf16.mxu0 0
      %905 = vmatpush1.bf16.msra.mxu0 0
      %906 = vmatprep.subr.bf16.mxu0 0
      %907 = vmatpush1.bf16.msra.mxu0 0
      %908 = vmatprep.subr.bf16.mxu0 0
      %909 = vmatpush1.bf16.msra.mxu0 0
      %910 = vmatprep.subr.bf16.mxu0 0
      %911 = vmatpush1.bf16.msra.mxu0 0
      %912 = vmatprep.subr.bf16.mxu0 0
      %913 = vmatpush1.bf16.msra.mxu0 0
      %914 = vmatprep.subr.bf16.mxu0 0
      %915 = vmatpush1.bf16.msra.mxu0 0
      %916 = vmatprep.subr.bf16.mxu0 0
      %917 = vmatpush1.bf16.msra.mxu0 0
      %918 = vmatprep.subr.bf16.mxu0 0
      %919 = vmatpush1.bf16.msra.mxu0 0
      %920 = vmatprep.subr.bf16.mxu0 0
      %921 = vmatpush1.bf16.msra.mxu0 0
      %922 = vmatprep.subr.bf16.mxu0 0
      %923 = vmatpush1.bf16.msra.mxu0 0
      %924 = vmatprep.subr.bf16.mxu0 0
      %925 = vmatpush1.bf16.msra.mxu0 0
      %926 = vmatprep.mubr.bf16.mxu0 0
      %927 = vmatmul.mubr.bf16.gmra.mrb[0].mxu0 %v842
      %v928 = vpop.f32.mrb[0].mxu0
      %v929 = vadd.f32 0.0, %v928
      %v930 = vpop.f32.mrb[0].mxu0
      %v931 = vpop.f32.mrb[0].mxu0
      %v932 = vpop.f32.mrb[0].mxu0
      %933 = vdwg.mxu0
      %v934 = vadd.f32 %v824, %v888
      %v935 = vadd.f32 %v825, %v890
      %v936 = vadd.f32 %v826, %v929
      %s937 = scalar_lea.vmem %s1, 28
      %v938 = vld [vmem:[%s937] sm:$0xf]
      %939 = vrot.lane.b32.xlu0 %v183, 91
      %v940 = vpop.permute.xlu0 %939
      %941 = vrot.lane.b32.xlu0 %v184, 91
      %v942 = vpop.permute.xlu0 %941
      %943 = vrot.lane.b32.xlu0 %v185, 91
      %v944 = vpop.permute.xlu0 %943
      %945 = vrot.lane.b32.xlu0 %v186, 91
      %v946 = vpop.permute.xlu0 %945
      %vm947 = vcmask 744448
      %v948 = vsel %vm947, %v940, %v942
      %v949 = vsel %vm947, %v942, %v944
      %v950 = vsel %vm947, %v944, %v946
      %v952 = vsel %vm199, %v938, 0
      %v955 = vsel %vm203, %v948, 0
      %v958 = vsel %vm203, %v949, 0
      %v961 = vsel %vm203, %v950, 0
      %963 = vmatprep.subr.bf16.mxu0 %v958
      %964 = vmatpush1.bf16.msra.mxu0 %v955
      %965 = vmatprep.subr.bf16.mxu0 0
      %966 = vmatpush1.bf16.msra.mxu0 0
      %967 = vmatprep.subr.bf16.mxu0 0
      %968 = vmatpush1.bf16.msra.mxu0 0
      %969 = vmatprep.subr.bf16.mxu0 0
      %970 = vmatpush1.bf16.msra.mxu0 0
      %971 = vmatprep.subr.bf16.mxu0 0
      %972 = vmatpush1.bf16.msra.mxu0 0
      %973 = vmatprep.subr.bf16.mxu0 0
      %974 = vmatpush1.bf16.msra.mxu0 0
      %975 = vmatprep.subr.bf16.mxu0 0
      %976 = vmatpush1.bf16.msra.mxu0 0
      %977 = vmatprep.subr.bf16.mxu0 0
      %978 = vmatpush1.bf16.msra.mxu0 0
      %979 = vmatprep.subr.bf16.mxu0 0
      %980 = vmatpush1.bf16.msra.mxu0 0
      %981 = vmatprep.subr.bf16.mxu0 0
      %982 = vmatpush1.bf16.msra.mxu0 0
      %983 = vmatprep.subr.bf16.mxu0 0
      %984 = vmatpush1.bf16.msra.mxu0 0
      %985 = vmatprep.subr.bf16.mxu0 0
      %986 = vmatpush1.bf16.msra.mxu0 0
      %987 = vmatprep.subr.bf16.mxu0 0
      %988 = vmatpush1.bf16.msra.mxu0 0
      %989 = vmatprep.subr.bf16.mxu0 0
      %990 = vmatpush1.bf16.msra.mxu0 0
      %991 = vmatprep.subr.bf16.mxu0 0
      %992 = vmatpush1.bf16.msra.mxu0 0
      %993 = vmatprep.subr.bf16.mxu0 0
      %994 = vmatpush1.bf16.msra.mxu0 0
      %995 = vmatprep.mubr.bf16.mxu0 0
      %996 = vmatmul.mubr.bf16.gmra.mrb[0].mxu0 %v952
      %v997 = vpop.f32.mrb[0].mxu0
      %v998 = vadd.f32 0.0, %v997
      %v999 = vpop.f32.mrb[0].mxu0
      %v1000 = vadd.f32 0.0, %v999
      %v1001 = vpop.f32.mrb[0].mxu0
      %v1002 = vpop.f32.mrb[0].mxu0
      %1003 = vdwg.mxu0
      %1004 = vmatprep.subr.bf16.mxu0 0
      %1005 = vmatpush1.bf16.msra.mxu0 %v961
      %1006 = vmatprep.subr.bf16.mxu0 0
      %1007 = vmatpush1.bf16.msra.mxu0 0
      %1008 = vmatprep.subr.bf16.mxu0 0
      %1009 = vmatpush1.bf16.msra.mxu0 0
      %1010 = vmatprep.subr.bf16.mxu0 0
      %1011 = vmatpush1.bf16.msra.mxu0 0
      %1012 = vmatprep.subr.bf16.mxu0 0
      %1013 = vmatpush1.bf16.msra.mxu0 0
      %1014 = vmatprep.subr.bf16.mxu0 0
      %1015 = vmatpush1.bf16.msra.mxu0 0
      %1016 = vmatprep.subr.bf16.mxu0 0
      %1017 = vmatpush1.bf16.msra.mxu0 0
      %1018 = vmatprep.subr.bf16.mxu0 0
      %1019 = vmatpush1.bf16.msra.mxu0 0
      %1020 = vmatprep.subr.bf16.mxu0 0
      %1021 = vmatpush1.bf16.msra.mxu0 0
      %1022 = vmatprep.subr.bf16.mxu0 0
      %1023 = vmatpush1.bf16.msra.mxu0 0
      %1024 = vmatprep.subr.bf16.mxu0 0
      %1025 = vmatpush1.bf16.msra.mxu0 0
      %1026 = vmatprep.subr.bf16.mxu0 0
      %1027 = vmatpush1.bf16.msra.mxu0 0
      %1028 = vmatprep.subr.bf16.mxu0 0
      %1029 = vmatpush1.bf16.msra.mxu0 0
      %1030 = vmatprep.subr.bf16.mxu0 0
      %1031 = vmatpush1.bf16.msra.mxu0 0
      %1032 = vmatprep.subr.bf16.mxu0 0
      %1033 = vmatpush1.bf16.msra.mxu0 0
      %1034 = vmatprep.subr.bf16.mxu0 0
      %1035 = vmatpush1.bf16.msra.mxu0 0
      %1036 = vmatprep.mubr.bf16.mxu0 0
      %1037 = vmatmul.mubr.bf16.gmra.mrb[0].mxu0 %v952
      %v1038 = vpop.f32.mrb[0].mxu0
      %v1039 = vadd.f32 0.0, %v1038
      %v1040 = vpop.f32.mrb[0].mxu0
      %v1041 = vpop.f32.mrb[0].mxu0
      %v1042 = vpop.f32.mrb[0].mxu0
      %1043 = vdwg.mxu0
      %v1044 = vadd.f32 %v934, %v998
      %v1045 = vadd.f32 %v935, %v1000
      %v1046 = vadd.f32 %v936, %v1039
      %s1047 = scalar_lea.vmem %s1, 32
      %v1048 = vld [vmem:[%s1047] sm:$0xf]
      %1049 = vrot.lane.b32.xlu0 %v183, 90
      %v1050 = vpop.permute.xlu0 %1049
      %1051 = vrot.lane.b32.xlu0 %v184, 90
      %v1052 = vpop.permute.xlu0 %1051
      %1053 = vrot.lane.b32.xlu0 %v185, 90
      %v1054 = vpop.permute.xlu0 %1053
      %1055 = vrot.lane.b32.xlu0 %v186, 90
      %v1056 = vpop.permute.xlu0 %1055
      %vm1057 = vcmask 736256
      %v1058 = vsel %vm1057, %v1050, %v1052
      %v1059 = vsel %vm1057, %v1052, %v1054
      %v1060 = vsel %vm1057, %v1054, %v1056
      %v1062 = vsel %vm199, %v1048, 0
      %v1065 = vsel %vm203, %v1058, 0
      %v1068 = vsel %vm203, %v1059, 0
      %v1071 = vsel %vm203, %v1060, 0
      %1073 = vmatprep.subr.bf16.mxu0 %v1068
      %1074 = vmatpush1.bf16.msra.mxu0 %v1065
      %1075 = vmatprep.subr.bf16.mxu0 0
      %1076 = vmatpush1.bf16.msra.mxu0 0
      %1077 = vmatprep.subr.bf16.mxu0 0
      %1078 = vmatpush1.bf16.msra.mxu0 0
      %1079 = vmatprep.subr.bf16.mxu0 0
      %1080 = vmatpush1.bf16.msra.mxu0 0
      %1081 = vmatprep.subr.bf16.mxu0 0
      %1082 = vmatpush1.bf16.msra.mxu0 0
      %1083 = vmatprep.subr.bf16.mxu0 0
      %1084 = vmatpush1.bf16.msra.mxu0 0
      %1085 = vmatprep.subr.bf16.mxu0 0
      %1086 = vmatpush1.bf16.msra.mxu0 0
      %1087 = vmatprep.subr.bf16.mxu0 0
      %1088 = vmatpush1.bf16.msra.mxu0 0
      %1089 = vmatprep.subr.bf16.mxu0 0
      %1090 = vmatpush1.bf16.msra.mxu0 0
      %1091 = vmatprep.subr.bf16.mxu0 0
      %1092 = vmatpush1.bf16.msra.mxu0 0
      %1093 = vmatprep.subr.bf16.mxu0 0
      %1094 = vmatpush1.bf16.msra.mxu0 0
      %1095 = vmatprep.subr.bf16.mxu0 0
      %1096 = vmatpush1.bf16.msra.mxu0 0
      %1097 = vmatprep.subr.bf16.mxu0 0
      %1098 = vmatpush1.bf16.msra.mxu0 0
      %1099 = vmatprep.subr.bf16.mxu0 0
      %1100 = vmatpush1.bf16.msra.mxu0 0
      %1101 = vmatprep.subr.bf16.mxu0 0
      %1102 = vmatpush1.bf16.msra.mxu0 0
      %1103 = vmatprep.subr.bf16.mxu0 0
      %1104 = vmatpush1.bf16.msra.mxu0 0
      %1105 = vmatprep.mubr.bf16.mxu0 0
      %1106 = vmatmul.mubr.bf16.gmra.mrb[0].mxu0 %v1062
      %v1107 = vpop.f32.mrb[0].mxu0
      %v1108 = vadd.f32 0.0, %v1107
      %v1109 = vpop.f32.mrb[0].mxu0
      %v1110 = vadd.f32 0.0, %v1109
      %v1111 = vpop.f32.mrb[0].mxu0
      %v1112 = vpop.f32.mrb[0].mxu0
      %1113 = vdwg.mxu0
      %1114 = vmatprep.subr.bf16.mxu0 0
      %1115 = vmatpush1.bf16.msra.mxu0 %v1071
      %1116 = vmatprep.subr.bf16.mxu0 0
      %1117 = vmatpush1.bf16.msra.mxu0 0
      %1118 = vmatprep.subr.bf16.mxu0 0
      %1119 = vmatpush1.bf16.msra.mxu0 0
      %1120 = vmatprep.subr.bf16.mxu0 0
      %1121 = vmatpush1.bf16.msra.mxu0 0
      %1122 = vmatprep.subr.bf16.mxu0 0
      %1123 = vmatpush1.bf16.msra.mxu0 0
      %1124 = vmatprep.subr.bf16.mxu0 0
      %1125 = vmatpush1.bf16.msra.mxu0 0
      %1126 = vmatprep.subr.bf16.mxu0 0
      %1127 = vmatpush1.bf16.msra.mxu0 0
      %1128 = vmatprep.subr.bf16.mxu0 0
      %1129 = vmatpush1.bf16.msra.mxu0 0
      %1130 = vmatprep.subr.bf16.mxu0 0
      %1131 = vmatpush1.bf16.msra.mxu0 0
      %1132 = vmatprep.subr.bf16.mxu0 0
      %1133 = vmatpush1.bf16.msra.mxu0 0
      %1134 = vmatprep.subr.bf16.mxu0 0
      %1135 = vmatpush1.bf16.msra.mxu0 0
      %1136 = vmatprep.subr.bf16.mxu0 0
      %1137 = vmatpush1.bf16.msra.mxu0 0
      %1138 = vmatprep.subr.bf16.mxu0 0
      %1139 = vmatpush1.bf16.msra.mxu0 0
      %1140 = vmatprep.subr.bf16.mxu0 0
      %1141 = vmatpush1.bf16.msra.mxu0 0
      %1142 = vmatprep.subr.bf16.mxu0 0
      %1143 = vmatpush1.bf16.msra.mxu0 0
      %1144 = vmatprep.subr.bf16.mxu0 0
      %1145 = vmatpush1.bf16.msra.mxu0 0
      %1146 = vmatprep.mubr.bf16.mxu0 0
      %1147 = vmatmul.mubr.bf16.gmra.mrb[0].mxu0 %v1062
      %v1148 = vpop.f32.mrb[0].mxu0
      %v1149 = vadd.f32 0.0, %v1148
      %v1150 = vpop.f32.mrb[0].mxu0
      %v1151 = vpop.f32.mrb[0].mxu0
      %v1152 = vpop.f32.mrb[0].mxu0
      %1153 = vdwg.mxu0
      %v1154 = vadd.f32 %v1044, %v1108
      %v1155 = vadd.f32 %v1045, %v1110
      %v1156 = vadd.f32 %v1046, %v1149
      %v1157 = vld [vmem:[%s2] sm:$0xff]
      %1159 = vset.pattern.permute.xlu0 0
      %1160 = vperm.xlu0 %1159, %v1157
      %v1161 = vpop.permute.xlu0 %1160
      %v1163 = vadd.f32 %v1154, %v1161
      %v1164 = vadd.f32 %v1155, %v1161
      %v1165 = vadd.f32 %v1156, %v1161
      %v1166 = vmax.f32 %v1163, 0.0
      %v1167 = vmax.f32 %v1164, 0.0
      %v1168 = vmax.f32 %v1165, 0.0
      %1169 = vst [vmem:[%s170] sm:$0xff] %v1166
      %1170 = vst [vmem:[%s170 + $0x8] sm:$0xff] %v1167
      %1171 = vst [vmem:[%s170 + $0x10] sm:$0xff] %v1168
      %p1172 = scmp.lt.s32.totalorder %s14, 1
      %s1173 = scalar_select %p1172, %s14, 1
      %s1174 = smul.addr %s1173, 3
      %s1175 = smul.addr %s1174, 8
      %s1176 = scalar_lea.vmem %s3, %s1175
      // Predicated region
      $region33: #{_run.1} parent=31 // pred_check
        %p1177 = pneg %p100
      $region34: #{_run.1} parent=31 // pred_check_branch
        %1179 = sbr.rel (%p1177) target = $region36
      $region35: #{_run.1} parent=31 // pred_region
        _
      $region36: #{_run.1} parent=31 // pred_fallthru
        _
    $region32: #{_run.1} parent=5 // pred_fallthru
      _
    %p1180 = scmp.le.s32.totalorder 2, %s9
    // Predicated region
    $region37: #{_run.1} parent=5 // pred_check
      %p1181 = pneg %p1180
    $region38: #{_run.1} parent=5 // pred_check_branch
      %1183 = sbr.rel (%p1181) target = $region40
    $region39: #{_run.1} parent=5 // pred_region
      %s1184 = ssub.s32 %s9, 2
      // Predicated region
      $region41: #{_run.1} parent=39 // pred_check
        %p1185 = pneg %p106
      $region42: #{_run.1} parent=39 // pred_check_branch
        %1187 = sbr.rel (%p1185) target = $region44
      $region43: #{_run.1} parent=39 // pred_region
        %p1188 = scmp.lt.s32.totalorder %s15, 1
        %s1189 = scalar_select %p1188, %s15, 1
        %s1190 = smul.addr %s1189, 3
        %s1191 = smul.addr %s1190, 8
        %s1192 = scalar_lea.vmem %s3, %s1191
      $region44: #{_run.1} parent=39 // pred_fallthru
        _
    $region40: #{_run.1} parent=5 // pred_fallthru
      _
  $region6: #{_run.1} parent=0 // loop_footer
    %s13 = sadd.s32 1, %s9
  $region7: #{_run.1} parent=0 // loop_footer_branch
    %8 = sbr.rel target = $region3
  $region8: #{_run.1} parent=0 // loop_exit
    _

</llo_original>
